<compile_context>
chip_gen: v5e
topology: v5e:2x2
jax: 0.10.0
libtpu: 0.0.40
codegen_flags: <defaults>
</compile_context>

<pallas_src>
import jax
import jax.numpy as jnp
from jax.experimental import pallas as pl
from jax.experimental.pallas import tpu as pltpu


def _residual_linear_kernel(x_ref, w_ref, b_ref, o_ref, acc_ref):
    """One (tm, D) output tile; grid = (row_tiles, k_tiles)."""
    k = pl.program_id(1)
    nk = pl.num_programs(1)
    tk = w_ref.shape[0]                                  # static block extent

    @pl.when(k == 0)
    def _():
        acc_ref[...] = jnp.zeros_like(acc_ref)

    start = pl.multiple_of(k * tk, tk)
    x_slab = x_ref[:, pl.ds(start, tk)]                  # (tm, tk) fp32 LHS slice
    acc_ref[...] += jnp.dot(
        x_slab.astype(jnp.bfloat16), w_ref[...],         # bf16 MXU inputs
        preferred_element_type=jnp.float32,              # fp32 accumulation
    )

    @pl.when(k == nk - 1)
    def _():
        # Bias + residual in fp32 (x_ref is the original fp32 row tile).
        o_ref[...] = (acc_ref[...] + b_ref[...] + x_ref[...]).astype(o_ref.dtype)


def _round_up(x, m):
    return ((x + m - 1) // m) * m


def residual_linear(x, w_bf16, b2d, *, tm=1024, tk=512):
    """Fused y = x @ W + b + x.

    x:      [B, S, D] float32 (residual path stays fp32)
    w_bf16: [D, D]    bfloat16 (pre-cast once; see make_residual_linear)
    b2d:    [1, D]    float32
    """
    B, S, D = x.shape
    M = B * S
    x2d = x.reshape(M, D)

    # ---- K (contraction) tiling -------------------------------------------
    tk = min(tk, D)
    if D % tk != 0 or tk % 128 != 0:
        tk = D                       # fall back to a single, resident K slab
    num_k = max(1, D // tk)

    # ---- M (row) tiling -----------------------------------------------------
    tm = min(tm, _round_up(M, 8))
    if pl.cdiv(M, tm) < 2 and M > 8:              # >= 2 tiles for v7x megacore
        tm = max(8, _round_up(pl.cdiv(M, 2), 8))

    # ---- VMEM budget (no double counting; capped for v7x's 64 MiB) ---------
    try:
        vmem_cap = int(pltpu.get_tpu_info().vmem_capacity_bytes)
    except Exception:
        vmem_cap = 64 << 20                        # conservative (v7x per-core)
    vmem_budget = (vmem_cap * 7) // 8

    w_bufs = 1 if num_k == 1 else 2                # weight grid-invariant iff num_k==1

    def _vmem_needed(tm_):
        return (2 * tm_ * D * 4                    # x tiles   (double-buffered)
                + 2 * tm_ * D * 4                  # out tiles (double-buffered)
                + w_bufs * tk * D * 2              # bf16 weight slab(s)
                + 2 * 8 * max(D, 128) * 4          # bias (padded block)
                + tm_ * D * 4)                     # fp32 accumulator scratch

    while _vmem_needed(tm) > vmem_budget and tm > 8:
        tm = max(8, _round_up(tm // 2, 8))

    vmem_limit = int(min(vmem_budget,
                         max(_vmem_needed(tm) + _vmem_needed(tm) // 4, 16 << 20)))

    grid = (pl.cdiv(M, tm), num_k)

    cost = pl.CostEstimate(
        flops=2 * M * D * D,
        transcendentals=0,
        bytes_accessed=2 * M * D * 4 + D * D * 2 + D * 4,
    )

    # Weight slab: single-buffer only when it is grid-invariant.
    if num_k == 1:
        w_spec = pl.BlockSpec((tk, D), lambda i, k: (k, 0),
                              pipeline_mode=pl.Buffered(1))
    else:
        w_spec = pl.BlockSpec((tk, D), lambda i, k: (k, 0))

    out2d = pl.pallas_call(
        _residual_linear_kernel,
        out_shape=jax.ShapeDtypeStruct((M, D), x.dtype),
        grid_spec=pltpu.PrefetchScalarGridSpec(
            num_scalar_prefetch=0,
            grid=grid,
            in_specs=[
                # Full x row tile, resident across K (LHS slices are taken
                # in-kernel; the same tile also feeds the residual add).
                pl.BlockSpec((tm, D), lambda i, k: (i, 0)),
                w_spec,
                # Bias: grid-invariant -> single buffer.
                pl.BlockSpec((1, D), lambda i, k: (0, 0),
                             pipeline_mode=pl.Buffered(1)),
            ],
            out_specs=pl.BlockSpec((tm, D), lambda i, k: (i, 0)),
            scratch_shapes=[pltpu.VMEM((tm, D), jnp.float32)],
        ),
        compiler_params=pltpu.CompilerParams(
            dimension_semantics=("parallel", "arbitrary"),
            vmem_limit_bytes=vmem_limit,
        ),
        cost_estimate=cost,
    )(x2d, w_bf16, b2d)

    return out2d.reshape(B, S, D)


def make_residual_linear(w, b, *, tm=1024, tk=512):
    """Hoists one-time parameter prep (bf16 weight cast, bias reshape) out of
    the per-call path and returns `apply(x) -> fn(x) + x`."""
    D = w.shape[0]
    w_bf16 = jnp.asarray(w, dtype=jnp.bfloat16)        # cast once, reused
    b2d = jnp.asarray(b, dtype=jnp.float32).reshape(1, D)

    def apply(x):
        return residual_linear(x, w_bf16, b2d, tm=tm, tk=tk)

    return apply


if __name__ == "__main__":
    # Small shapes: batch=2, seq=8, hidden=256.  D=256 with tk=128 exercises
    # the two-step K accumulation path; M=16 gives a 2-tile row grid.
    B, S, D = 2, 8, 256
    key = jax.random.PRNGKey(0)
    kx, kw, kb = jax.random.split(key, 3)

    x = jax.random.normal(kx, (B, S, D), dtype=jnp.float32)
    # Deterministic "Linear" parameters for the wrapped fn.
    w = jax.random.normal(kw, (D, D), dtype=jnp.float32) * 0.02
    b = jax.random.normal(kb, (D,), dtype=jnp.float32) * 0.02

    apply_fn = make_residual_linear(w, b, tm=1024, tk=128)
    y = jax.block_until_ready(apply_fn(x))

    # Reference in plain JAX: fn(x) + x (fp32).  Tolerances account for the
    # kernel's bf16 matmul inputs (fp32 accumulate); the residual path itself
    # is exact fp32.
    ref = jnp.einsum("bsd,de->bse", x, w) + b + x
    assert y.shape == ref.shape
    assert jnp.allclose(y, ref, atol=5e-2, rtol=5e-2), "mismatch vs reference"

    print("KERNEL_OK")
</pallas_src>

<mosaic_0001>
module attributes {stable_mosaic.version = 11 : i64} {
  func.func @_residual_linear_kernel(%arg0: i32, %arg1: i32, %arg2: memref<8x256xf32, #tpu.memory_space<vmem>>, %arg3: memref<128x256xbf16, #tpu.memory_space<vmem>>, %arg4: memref<1x256xf32, #tpu.memory_space<vmem>>, %arg5: memref<8x256xf32, #tpu.memory_space<vmem>>, %arg6: memref<8x256xf32, #tpu.memory_space<vmem>>) attributes {dimension_semantics = [#tpu.dimension_semantics<parallel>, #tpu.dimension_semantics<arbitrary>], iteration_bounds = array<i64: 2, 2>, scalar_prefetch = 0 : i64, scratch_operands = 1 : i64, tpu.core_type = #tpu.core_type<tc>, window_params = [{transform_indices = @transform_0, window_bounds = array<i64: 8, 256>}, {transform_indices = @transform_1, window_bounds = array<i64: 128, 256>}, {pipeline_mode = #tpu.pipeline_mode<synchronous>, transform_indices = @transform_2, window_bounds = array<i64: 1, 256>}, {transform_indices = @transform_3, window_bounds = array<i64: 8, 256>}]} {
    %c0_i32 = arith.constant 0 : i32
    %0 = arith.cmpi eq, %arg1, %c0_i32 : i32
    %1 = arith.extui %0 : i1 to i32
    %c0_i32_0 = arith.constant 0 : i32
    %2 = arith.cmpi ne, %1, %c0_i32_0 : i32
    scf.if %2 {
      %cst_8 = arith.constant 0.000000e+00 : f32
      %16 = vector.broadcast %cst_8 : f32 to vector<8x256xf32>
      %c0_9 = arith.constant 0 : index
      %c0_10 = arith.constant 0 : index
      %17 = vector.load %arg6[%c0_9, %c0_10] : memref<8x256xf32, #tpu.memory_space<vmem>>, vector<8x256xf32>
      tpu.vector_store %arg6[%c0_9, %c0_10], %16 {strides = array<i32>} : memref<8x256xf32, #tpu.memory_space<vmem>>, vector<8x256xf32>,
    } else {
    }
    %c128_i32 = arith.constant 128 : i32
    %3 = arith.muli %arg1, %c128_i32 : i32
    %4 = tpu.assume_multiple %3, 128 : i32
    %c0 = arith.constant 0 : index
    %5 = arith.index_cast %4 : i32 to index
    %6 = vector.load %arg2[%c0, %5] : memref<8x256xf32, #tpu.memory_space<vmem>>, vector<8x128xf32>
    %c0_1 = arith.constant 0 : index
    %c0_2 = arith.constant 0 : index
    %7 = vector.load %arg6[%c0_1, %c0_2] : memref<8x256xf32, #tpu.memory_space<vmem>>, vector<8x256xf32>
    %8 = arith.truncf %6 : vector<8x128xf32> to vector<8x128xbf16>
    %c0_3 = arith.constant 0 : index
    %c0_4 = arith.constant 0 : index
    %9 = vector.load %arg3[%c0_3, %c0_4] : memref<128x256xbf16, #tpu.memory_space<vmem>>, vector<128x256xbf16>
    %cst = arith.constant dense<0.000000e+00> : vector<8x256xf32>
    %10 = tpu.matmul %8, %9, %cst {dimension_numbers = #tpu.dot_dimension_numbers<[1], [0], [0], [1], [0, 0, 1, 1], [], []>} : vector<8x128xbf16>, vector<128x256xbf16>, vector<8x256xf32> -> vector<8x256xf32>
    %11 = arith.addf %7, %10 : vector<8x256xf32>
    %c0_5 = arith.constant 0 : index
    %c0_6 = arith.constant 0 : index
    %12 = vector.load %arg6[%c0_5, %c0_6] : memref<8x256xf32, #tpu.memory_space<vmem>>, vector<8x256xf32>
    tpu.vector_store %arg6[%c0_5, %c0_6], %11 {strides = array<i32>} : memref<8x256xf32, #tpu.memory_space<vmem>>, vector<8x256xf32>,
    %c1_i32 = arith.constant 1 : i32
    %13 = arith.cmpi eq, %arg1, %c1_i32 : i32
    %14 = arith.extui %13 : i1 to i32
    %c0_i32_7 = arith.constant 0 : i32
    %15 = arith.cmpi ne, %14, %c0_i32_7 : i32
    scf.if %15 {
      %c0_8 = arith.constant 0 : index
      %c0_9 = arith.constant 0 : index
      %16 = vector.load %arg6[%c0_8, %c0_9] : memref<8x256xf32, #tpu.memory_space<vmem>>, vector<8x256xf32>
      %c0_10 = arith.constant 0 : index
      %c0_11 = arith.constant 0 : index
      %17 = vector.load %arg4[%c0_10, %c0_11] : memref<1x256xf32, #tpu.memory_space<vmem>>, vector<1x256xf32>
      %18 = vector.broadcast %17 : vector<1x256xf32> to vector<8x256xf32>
      %19 = arith.addf %16, %18 : vector<8x256xf32>
      %c0_12 = arith.constant 0 : index
      %c0_13 = arith.constant 0 : index
      %20 = vector.load %arg2[%c0_12, %c0_13] : memref<8x256xf32, #tpu.memory_space<vmem>>, vector<8x256xf32>
      %21 = arith.addf %19, %20 : vector<8x256xf32>
      %c0_14 = arith.constant 0 : index
      %c0_15 = arith.constant 0 : index
      %22 = vector.load %arg5[%c0_14, %c0_15] : memref<8x256xf32, #tpu.memory_space<vmem>>, vector<8x256xf32>
      tpu.vector_store %arg5[%c0_14, %c0_15], %21 {strides = array<i32>} : memref<8x256xf32, #tpu.memory_space<vmem>>, vector<8x256xf32>,
    } else {
    }
    return
  }
  func.func @transform_0(%arg0: i32, %arg1: i32) -> (i32, i32) {
    %c0_i32 = arith.constant 0 : i32
    %c0_i32_0 = arith.constant 0 : i32
    return %arg0, %c0_i32 : i32, i32
  }
  func.func @transform_1(%arg0: i32, %arg1: i32) -> (i32, i32) {
    %c0_i32 = arith.constant 0 : i32
    %c0_i32_0 = arith.constant 0 : i32
    return %arg1, %c0_i32 : i32, i32
  }
  func.func @transform_2(%arg0: i32, %arg1: i32) -> (i32, i32) {
    %c0_i32 = arith.constant 0 : i32
    %c0_i32_0 = arith.constant 0 : i32
    %c0_i32_1 = arith.constant 0 : i32
    return %c0_i32, %c0_i32_0 : i32, i32
  }
  func.func @transform_3(%arg0: i32, %arg1: i32) -> (i32, i32) {
    %c0_i32 = arith.constant 0 : i32
    %c0_i32_0 = arith.constant 0 : i32
    return %arg0, %c0_i32 : i32, i32
  }
}

</mosaic_0001>

<llo_original>
// kernel: tpu_custom_call.1
$region0: #{tpu_custom_call.1}
  #allocation0 [shape = 'u32[]', space=smem, size = 0x4, offset = 0x4, fixed_abs, tag = 'smem constant byte address 0x4 - core index']
  #allocation1 [shape = 'u32[72,128]{1,0:T(1,128)}', space=vmem, size = 0x9000, scoped, tag = 'internal scratch']
  #allocation2 [shape = 'f32[8,256]{1,0:T(8,128)}', space=vmem, size = 0x2000, scoped, tag = 'scratch operand']
  %s0 = inlined_call_operand.hbm [shape: f32[16,256], index: 0, kind: input, shape index: {}]
  %s1 = inlined_call_operand.hbm [shape: bf16[256,256], index: 1, kind: input, shape index: {}]
  %s2 = inlined_call_operand.hbm [shape: f32[1,256], index: 2, kind: input, shape index: {}]
  %s3 = inlined_call_operand.hbm [shape: f32[16,256], index: 3, kind: output, shape index: {}]
  %s4 = sld [smem:[#allocation0]]
  $region65: #{tpu_custom_call.1} parent=0
    _
  %s6 = ssub.s32 1, %s4
  %s7 = scalar_select 0, %s6, %s4
  $region1: #{tpu_custom_call.1} parent=0
    #allocation3 [shape = 'u8[16384]{0}', space=vmem, size = 0x4000, scoped, tag = 'input window, operand 0']
    #allocation4 [shape = 's32[2]{0}', space=sflag, size = 0x8, scoped, tag = 'scoped memory for tpu_custom_call.1']
    #allocation5 [shape = 's32[2]{0}', space=sflag, size = 0x8, scoped, tag = 'scoped memory for tpu_custom_call.1']
    #allocation6 [shape = 'u8[131072]{0}', space=vmem, size = 0x20000, scoped, tag = 'input window, operand 1']
    #allocation7 [shape = 's32[2]{0}', space=sflag, size = 0x8, scoped, tag = 'scoped memory for tpu_custom_call.1']
    #allocation8 [shape = 'u8[1024]{0}', space=vmem, size = 0x400, scoped, tag = 'input window, operand 2, single buffered']
    #allocation9 [shape = 'u8[16384]{0}', space=vmem, size = 0x4000, scoped, tag = 'output window, operand 0']
    %8 = vsyncpa [#allocation4], 0
    %s9 = scalar_lea.sflag [#allocation4], 1
    %10 = vsyncpa %s9, 0
    %11 = vsyncpa [#allocation7], 0
    %s12 = scalar_lea.sflag [#allocation7], 1
    %13 = vsyncpa %s12, 0
    %14 = vsyncpa [#allocation5], 0
    %s15 = scalar_lea.sflag [#allocation5], 1
    %16 = vsyncpa %s15, 0
    loop: start=0, step=1, limit=6
    $region2: #{tpu_custom_call.1} parent=1 // loop_pre_header
      _
    $region3: #{tpu_custom_call.1} parent=1 // loop_header
      %s18 = sphi 0, %s22
      %p19 = scmp.ge.s32.totalorder %s18, 6
      %s25 = sphi 0, %s37
      %s26 = sphi 0, %s33
      %s27 = sphi 0, %s25
      %s28 = sphi 0, %s26
      %s29 = sphi 0, %s27
      %s30 = sphi 0, %s28
      %s40 = sphi 0, %s42
      %s43 = sphi 0, %s40
      %s44 = sphi 0, %s43
      %s60 = sphi 0, %s44
      %s66 = sphi 0, %s68
      %s69 = sphi 0, %s66
      %s70 = sphi 0, %s69
      %s86 = sphi 0, %s70
      %s90 = sphi 0, %s90
      %s92 = sphi 0, %s90
      %s93 = sphi 0, %s92
      %s107 = sphi 0, %s93
      %s113 = sphi 0, %s115
      %s116 = sphi 0, %s113
      %s117 = sphi 0, %s116
      %s133 = sphi 0, %s117
    $region4: #{tpu_custom_call.1} parent=1 // loop_header_branch
      %21 = sbr.rel (%p19) target = $region8
    $region5: #{tpu_custom_call.1} parent=1 // loop_body
      %s23 = ssub.s32 %s18, 1
      %s24 = ssub.s32 %s18, 2
      %s31 = sadd.s32 1, %s26
      %p32 = scmp.ge.s32.totalorder %s31, 2
      %s33 = scalar_select %p32, 0, %s31
      %s34 = sadd.s32 1, %s25
      %s35 = scalar_select %p32, %s34, %s25
      %p36 = scmp.ge.s32.totalorder %s35, 2
      %s37 = scalar_select %p36, 0, %s35
      %s38 = ssub.s32 %s25, %s37
      %p39 = scmp.eq.s32.totalorder %s38, 0
      %s41 = sadd.s32 %s40, 1
      %s42 = scalar_select %p39, %s40, %s41
      %p45 = pneg %p39
      %p46 = scmp.eq.s32.totalorder %s18, 3
      %p47 = por %p45, %p46
      %p48 = scmp.ne.s32.totalorder %s40, %s43
      %p49 = scmp.eq.s32.totalorder %s18, 0
      %p50 = por %p48, %p49
      %p51 = scmp.ne.s32.totalorder %s40, %s43
      %p52 = scmp.eq.s32.totalorder %s23, 3
      %p53 = por %p51, %p52
      %p54 = scmp.ne.s32.totalorder %s43, %s44
      %p55 = scmp.eq.s32.totalorder %s23, 0
      %p56 = por %p54, %p55
      %p57 = scmp.ne.s32.totalorder %s43, %s44
      %p58 = scmp.eq.s32.totalorder %s24, 3
      %p59 = por %p57, %p58
      %p61 = scmp.ne.s32.totalorder %s44, %s60
      %p62 = scmp.eq.s32.totalorder %s24, 0
      %p63 = por %p61, %p62
      %s64 = ssub.s32 %s26, %s33
      %p65 = scmp.eq.s32.totalorder %s64, 0
      %s67 = sadd.s32 %s66, 1
      %s68 = scalar_select %p65, %s66, %s67
      %p71 = pneg %p65
      %p72 = scmp.eq.s32.totalorder %s18, 3
      %p73 = por %p71, %p72
      %p74 = scmp.ne.s32.totalorder %s66, %s69
      %p75 = scmp.eq.s32.totalorder %s18, 0
      %p76 = por %p74, %p75
      %p77 = scmp.ne.s32.totalorder %s66, %s69
      %p78 = scmp.eq.s32.totalorder %s23, 3
      %p79 = por %p77, %p78
      %p80 = scmp.ne.s32.totalorder %s69, %s70
      %p81 = scmp.eq.s32.totalorder %s23, 0
      %p82 = por %p80, %p81
      %p83 = scmp.ne.s32.totalorder %s69, %s70
      %p84 = scmp.eq.s32.totalorder %s24, 3
      %p85 = por %p83, %p84
      %p87 = scmp.ne.s32.totalorder %s70, %s86
      %p88 = scmp.eq.s32.totalorder %s24, 0
      %p89 = por %p87, %p88
      %s91 = sadd.s32 %s90, 1
      %p94 = scmp.eq.s32.totalorder %s18, 3
      %p95 = scmp.ne.s32.totalorder %s90, %s92
      %p96 = scmp.eq.s32.totalorder %s18, 0
      %p97 = por %p95, %p96
      %p98 = scmp.ne.s32.totalorder %s90, %s92
      %p99 = scmp.eq.s32.totalorder %s23, 3
      %p100 = por %p98, %p99
      %p101 = scmp.ne.s32.totalorder %s92, %s93
      %p102 = scmp.eq.s32.totalorder %s23, 0
      %p103 = por %p101, %p102
      %p104 = scmp.ne.s32.totalorder %s92, %s93
      %p105 = scmp.eq.s32.totalorder %s24, 3
      %p106 = por %p104, %p105
      %p108 = scmp.ne.s32.totalorder %s93, %s107
      %p109 = scmp.eq.s32.totalorder %s24, 0
      %p110 = por %p108, %p109
      %s111 = ssub.s32 %s25, %s37
      %p112 = scmp.eq.s32.totalorder %s111, 0
      %s114 = sadd.s32 %s113, 1
      %s115 = scalar_select %p112, %s113, %s114
      %p118 = pneg %p112
      %p119 = scmp.eq.s32.totalorder %s18, 3
      %p120 = por %p118, %p119
      %p121 = scmp.ne.s32.totalorder %s113, %s116
      %p122 = scmp.eq.s32.totalorder %s18, 0
      %p123 = por %p121, %p122
      %p124 = scmp.ne.s32.totalorder %s113, %s116
      %p125 = scmp.eq.s32.totalorder %s23, 3
      %p126 = por %p124, %p125
      %p127 = scmp.ne.s32.totalorder %s116, %s117
      %p128 = scmp.eq.s32.totalorder %s23, 0
      %p129 = por %p127, %p128
      %p130 = scmp.ne.s32.totalorder %s116, %s117
      %p131 = scmp.eq.s32.totalorder %s24, 3
      %p132 = por %p130, %p131
      %p134 = scmp.ne.s32.totalorder %s117, %s133
      %p135 = scmp.eq.s32.totalorder %s24, 0
      %p136 = por %p134, %p135
      %p137 = scmp.le.s32.totalorder 1, %s18
      %p138 = scmp.lt.s32.totalorder %s18, 5
      %p139 = pnand %p137, %p138
      %p140 = pneg %p139
      // Predicated region
      $region9: #{tpu_custom_call.1} parent=5 // pred_check
        _
      $region10: #{tpu_custom_call.1} parent=5 // pred_check_branch
        %142 = sbr.rel (%p139) target = $region12
      $region11: #{tpu_custom_call.1} parent=5 // pred_region
        %s143 = ssub.s32 %s18, 1
        // Predicated region
        $region13: #{tpu_custom_call.1} parent=11 // pred_check
          %p144 = pneg %p103
        $region14: #{tpu_custom_call.1} parent=11 // pred_check_branch
          %146 = sbr.rel (%p144) target = $region16
        $region15: #{tpu_custom_call.1} parent=11 // pred_region
          %148 = vsyncadd [#allocation7], 0
          %s150 = sshll.u32 %s2, 4
          %s151 = int_to_ptr.hbm [resolvable:$true] %s150
          %s152 = sshll.u32 [#allocation8], 4
          %s153 = int_to_ptr.vmem [resolvable:$true] %s152
          %155 = dma.hbm_to_vmem [thread:$0]  %s151, 32, %s153, [#allocation7]
        $region16: #{tpu_custom_call.1} parent=11 // pred_fallthru
          _
      $region12: #{tpu_custom_call.1} parent=5 // pred_fallthru
        _
      %p156 = scmp.lt.s32.totalorder %s18, 4
      // Predicated region
      $region17: #{tpu_custom_call.1} parent=5 // pred_check
        %p157 = pneg %p156
      $region18: #{tpu_custom_call.1} parent=5 // pred_check_branch
        %159 = sbr.rel (%p157) target = $region20
      $region19: #{tpu_custom_call.1} parent=5 // pred_region
        // Predicated region
        $region21: #{tpu_custom_call.1} parent=19 // pred_check
          %p160 = pneg %p50
        $region22: #{tpu_custom_call.1} parent=19 // pred_check_branch
          %162 = sbr.rel (%p160) target = $region24
        $region23: #{tpu_custom_call.1} parent=19 // pred_region
          %s163 = sand.u32 %s40, 1
          %s164 = scalar_lea.sflag [#allocation4], %s163
          %s165 = sand.u32 %s40, 1
          %s166 = smul.addr %s165, 16
          %s167 = scalar_lea.vmem [#allocation3], %s166
          %169 = vsyncadd %s164, 0
          %s170 = smul.addr %s25, 2
          %s171 = smul.addr %s170, 8
          %s172 = scalar_lea.hbm %s0, %s171
          %s174 = sshll.u32 %s172, 4
          %s175 = int_to_ptr.hbm [resolvable:$true] %s174
          %s176 = sshll.u32 %s167, 4
          %s177 = int_to_ptr.vmem [resolvable:$true] %s176
          %179 = dma.hbm_to_vmem [thread:$0]  %s175, 256, %s177, %s164
        $region24: #{tpu_custom_call.1} parent=19 // pred_fallthru
          _
        // Predicated region
        $region25: #{tpu_custom_call.1} parent=19 // pred_check
          %p180 = pneg %p76
        $region26: #{tpu_custom_call.1} parent=19 // pred_check_branch
          %182 = sbr.rel (%p180) target = $region28
        $region27: #{tpu_custom_call.1} parent=19 // pred_region
          %s183 = sand.u32 %s18, 1
          %s184 = scalar_lea.sflag [#allocation7], %s183
          %s185 = sand.u32 %s66, 1
          %s186 = smul.addr %s185, 128
          %s187 = scalar_lea.vmem [#allocation6], %s186
          %s188 = smul.u32 16, %s26
          %190 = vsyncadd %s184, 0
          %s191 = smul.addr %s188, 2
          %s192 = smul.addr %s191, 4
          %s193 = scalar_lea.hbm %s1, %s192
          %s194 = sshll.u32 %s193, 4
          %s195 = int_to_ptr.hbm [resolvable:$true] %s194
          %s196 = sshll.u32 %s187, 4
          %s197 = int_to_ptr.vmem [resolvable:$true] %s196
          %202 = dma.hbm_to_vmem [thread:$0]  %s195, 2048, %s197, %s184, 128, 128, 8
        $region28: #{tpu_custom_call.1} parent=19 // pred_fallthru
          _
      $region20: #{tpu_custom_call.1} parent=5 // pred_fallthru
        _
      %p203 = scmp.le.s32.totalorder 1, %s18
      %p204 = scmp.lt.s32.totalorder %s18, 5
      %p205 = pnand %p203, %p204
      %p206 = pneg %p205
      // Predicated region
      $region29: #{tpu_custom_call.1} parent=5 // pred_check
        _
      $region30: #{tpu_custom_call.1} parent=5 // pred_check_branch
        %208 = sbr.rel (%p205) target = $region32
      $region31: #{tpu_custom_call.1} parent=5 // pred_region
        %s209 = ssub.s32 %s18, 1
        %s210 = sand.u32 %s43, 1
        %s211 = scalar_lea.sflag [#allocation4], %s210
        %s212 = sand.u32 %s43, 1
        %s213 = smul.addr %s212, 16
        %s214 = scalar_lea.vmem [#allocation3], %s213
        // Predicated region
        $region33: #{tpu_custom_call.1} parent=31 // pred_check
          %p215 = pneg %p56
        $region34: #{tpu_custom_call.1} parent=31 // pred_check_branch
          %217 = sbr.rel (%p215) target = $region36
        $region35: #{tpu_custom_call.1} parent=31 // pred_region
          %219 = dma.done %s211, 256
        $region36: #{tpu_custom_call.1} parent=31 // pred_fallthru
          _
        %s220 = sand.u32 %s23, 1
        %s221 = scalar_lea.sflag [#allocation7], %s220
        %s222 = sand.u32 %s69, 1
        %s223 = smul.addr %s222, 128
        %s224 = scalar_lea.vmem [#allocation6], %s223
        // Predicated region
        $region37: #{tpu_custom_call.1} parent=31 // pred_check
          %p225 = pneg %p82
        $region38: #{tpu_custom_call.1} parent=31 // pred_check_branch
          %227 = sbr.rel (%p225) target = $region40
        $region39: #{tpu_custom_call.1} parent=31 // pred_region
          %229 = dma.done %s221, 2048
        $region40: #{tpu_custom_call.1} parent=31 // pred_fallthru
          _
        // Predicated region
        $region41: #{tpu_custom_call.1} parent=31 // pred_check
          %p230 = pneg %p103
        $region42: #{tpu_custom_call.1} parent=31 // pred_check_branch
          %232 = sbr.rel (%p230) target = $region44
        $region43: #{tpu_custom_call.1} parent=31 // pred_region
          %234 = dma.done [#allocation7], 32
        $region44: #{tpu_custom_call.1} parent=31 // pred_fallthru
          _
        %s235 = sand.u32 %s43, 1
        %s236 = scalar_lea.sflag [#allocation4], %s235
        %s237 = sand.u32 %s43, 1
        %s238 = smul.addr %s237, 16
        %s239 = scalar_lea.vmem [#allocation3], %s238
        %p240 = pneg %p56
        %p241 = pneg %p53
        %s242 = sand.u32 %s23, 1
        %s243 = scalar_lea.sflag [#allocation7], %s242
        %s244 = sand.u32 %s69, 1
        %s245 = smul.addr %s244, 128
        %s246 = scalar_lea.vmem [#allocation6], %s245
        %p247 = pneg %p82
        %p248 = pneg %p79
        %p249 = pneg %p103
        %p250 = pneg %p100
        %p251 = pneg %p129
        %p252 = pneg %p126
        %s253 = sand.u32 %s116, 1
        %s254 = scalar_lea.sflag [#allocation5], %s253
        %s255 = sand.u32 %s116, 1
        %s256 = smul.addr %s255, 16
        %s257 = scalar_lea.vmem [#allocation9], %s256
        %s258 = smul.u32 16, %s28
        %p259 = scmp.eq.s32.totalorder %s28, 0
        // Predicated region
        $region45: #{tpu_custom_call.1} parent=31 // pred_check
          %p260 = pneg %p259
        $region46: #{tpu_custom_call.1} parent=31 // pred_check_branch
          %262 = sbr.rel (%p260) target = $region48
        $region47: #{tpu_custom_call.1} parent=31 // pred_region
          %263 = vst [vmem:[#allocation2] sm:$0xff] 0.0
          %264 = vst [vmem:[#allocation2 + $0x8] sm:$0xff] 0.0
        $region48: #{tpu_custom_call.1} parent=31 // pred_fallthru
          _
        %s265 = smul.u32 %s28, 128
        %s266 = sshra.s32 %s265, 7
        %s267 = sand.u32 %s265, 127
        %s268 = smul.addr %s266, 8
        %s269 = scalar_lea.vmem %s214, %s268 [#allocation3]
        %v270 = vld [vmem:[%s269] sm:$0xff]
        %v271 = vld [vmem:[#allocation2] sm:$0xff]
        %v272 = vld [vmem:[#allocation2 + $0x8] sm:$0xff]
        %v273 = vpack.c.bf16 %v270, %v270
        %v274 = vld [vmem:[%s224] sm:$0xff]
        %v275 = vld [vmem:[%s224 + $0x8] sm:$0xff]
        %v276 = vld [vmem:[%s224 + $0x10] sm:$0xff]
        %v277 = vld [vmem:[%s224 + $0x18] sm:$0xff]
        %v278 = vld [vmem:[%s224 + $0x20] sm:$0xff]
        %v279 = vld [vmem:[%s224 + $0x28] sm:$0xff]
        %v280 = vld [vmem:[%s224 + $0x30] sm:$0xff]
        %v281 = vld [vmem:[%s224 + $0x38] sm:$0xff]
        %v282 = vld [vmem:[%s224 + $0x40] sm:$0xff]
        %v283 = vld [vmem:[%s224 + $0x48] sm:$0xff]
        %v284 = vld [vmem:[%s224 + $0x50] sm:$0xff]
        %v285 = vld [vmem:[%s224 + $0x58] sm:$0xff]
        %v286 = vld [vmem:[%s224 + $0x60] sm:$0xff]
        %v287 = vld [vmem:[%s224 + $0x68] sm:$0xff]
        %v288 = vld [vmem:[%s224 + $0x70] sm:$0xff]
        %v289 = vld [vmem:[%s224 + $0x78] sm:$0xff]
        %v306 = vunpack.c.l.b16 %v274
        %v307 = vunpack.c.h.b16 %v274
        %v308 = vunpack.c.l.b16 %v275
        %v309 = vunpack.c.h.b16 %v275
        %v310 = vunpack.c.l.b16 %v276
        %v311 = vunpack.c.h.b16 %v276
        %v312 = vunpack.c.l.b16 %v277
        %v313 = vunpack.c.h.b16 %v277
        %v314 = vunpack.c.l.b16 %v278
        %v315 = vunpack.c.h.b16 %v278
        %v316 = vunpack.c.l.b16 %v279
        %v317 = vunpack.c.h.b16 %v279
        %v318 = vunpack.c.l.b16 %v280
        %v319 = vunpack.c.h.b16 %v280
        %v320 = vunpack.c.l.b16 %v281
        %v321 = vunpack.c.h.b16 %v281
        %v322 = vunpack.c.l.b16 %v282
        %v323 = vunpack.c.h.b16 %v282
        %v324 = vunpack.c.l.b16 %v283
        %v325 = vunpack.c.h.b16 %v283
        %v326 = vunpack.c.l.b16 %v284
        %v327 = vunpack.c.h.b16 %v284
        %v328 = vunpack.c.l.b16 %v285
        %v329 = vunpack.c.h.b16 %v285
        %v330 = vunpack.c.l.b16 %v286
        %v331 = vunpack.c.h.b16 %v286
        %v332 = vunpack.c.l.b16 %v287
        %v333 = vunpack.c.h.b16 %v287
        %v334 = vunpack.c.l.b16 %v288
        %v335 = vunpack.c.h.b16 %v288
        %v336 = vunpack.c.l.b16 %v289
        %v337 = vunpack.c.h.b16 %v289
        %v338 = vpack.c.b16 %v308, %v306
        %v339 = vpack.c.b16 %v309, %v307
        %v340 = vpack.c.b16 %v312, %v310
        %v341 = vpack.c.b16 %v313, %v311
        %v342 = vpack.c.b16 %v316, %v314
        %v343 = vpack.c.b16 %v317, %v315
        %v344 = vpack.c.b16 %v320, %v318
        %v345 = vpack.c.b16 %v321, %v319
        %v346 = vpack.c.b16 %v324, %v322
        %v347 = vpack.c.b16 %v325, %v323
        %v348 = vpack.c.b16 %v328, %v326
        %v349 = vpack.c.b16 %v329, %v327
        %v350 = vpack.c.b16 %v332, %v330
        %v351 = vpack.c.b16 %v333, %v331
        %v352 = vpack.c.b16 %v336, %v334
        %v353 = vpack.c.b16 %v337, %v335
        %370 = vmatpush.bf16.msra.mxu0 %v352
        %371 = vmatpush.bf16.msra.mxu0 %v350
        %372 = vmatpush.bf16.msra.mxu0 %v348
        %373 = vmatpush.bf16.msra.mxu0 %v346
        %374 = vmatpush.bf16.msra.mxu0 %v344
        %375 = vmatpush.bf16.msra.mxu0 %v342
        %376 = vmatpush.bf16.msra.mxu0 %v340
        %377 = vmatpush.bf16.msra.mxu0 %v338
        %378 = vmatmul.bf16.gmra.mxu0 %v273
        %v379 = vpop.f32.mrf.mxu0
        %v380 = vadd.f32 0.0, %v379
        %v381 = vpop.f32.mrf.mxu0
        %382 = vdwg.mxu0
        %383 = vmatpush.bf16.msra.mxu0 %v353
        %384 = vmatpush.bf16.msra.mxu0 %v351
        %385 = vmatpush.bf16.msra.mxu0 %v349
        %386 = vmatpush.bf16.msra.mxu0 %v347
        %387 = vmatpush.bf16.msra.mxu0 %v345
        %388 = vmatpush.bf16.msra.mxu0 %v343
        %389 = vmatpush.bf16.msra.mxu0 %v341
        %390 = vmatpush.bf16.msra.mxu0 %v339
        %391 = vmatmul.bf16.gmra.mxu0 %v273
        %v392 = vpop.f32.mrf.mxu0
        %v393 = vadd.f32 0.0, %v392
        %v394 = vpop.f32.mrf.mxu0
        %395 = vdwg.mxu0
        %v396 = vadd.f32 %v271, %v380
        %v397 = vadd.f32 %v272, %v393
        %398 = vst [vmem:[#allocation2] sm:$0xff] %v396
        %399 = vst [vmem:[#allocation2 + $0x8] sm:$0xff] %v397
        %p400 = scmp.eq.s32.totalorder %s28, 1
        // Predicated region
        $region49: #{tpu_custom_call.1} parent=31 // pred_check
          %p401 = pneg %p400
        $region50: #{tpu_custom_call.1} parent=31 // pred_check_branch
          %403 = sbr.rel (%p401) target = $region52
        $region51: #{tpu_custom_call.1} parent=31 // pred_region
          %v404 = vld [vmem:[#allocation2] sm:$0xff]
          %v405 = vld [vmem:[#allocation2 + $0x8] sm:$0xff]
          %v406 = vld [vmem:[#allocation8] sm:$0x3]
          %v408 = vperm.slane %v406, 0
          %v409 = vperm.slane %v406, 1
          %v412 = vadd.f32 %v404, %v408
          %v413 = vadd.f32 %v405, %v409
          %v414 = vld [vmem:[%s214] sm:$0xff]
          %v415 = vld [vmem:[%s214 + $0x8] sm:$0xff]
          %v416 = vadd.f32 %v412, %v414
          %v417 = vadd.f32 %v413, %v415
          %418 = vst [vmem:[%s257] sm:$0xff] %v416
          %419 = vst [vmem:[%s257 + $0x8] sm:$0xff] %v417
        $region52: #{tpu_custom_call.1} parent=31 // pred_fallthru
          _
        %s420 = sand.u32 %s116, 1
        %s421 = scalar_lea.sflag [#allocation5], %s420
        %s422 = sand.u32 %s116, 1
        %s423 = smul.addr %s422, 16
        %s424 = scalar_lea.vmem [#allocation9], %s423
        // Predicated region
        $region53: #{tpu_custom_call.1} parent=31 // pred_check
          %p425 = pneg %p126
        $region54: #{tpu_custom_call.1} parent=31 // pred_check_branch
          %427 = sbr.rel (%p425) target = $region56
        $region55: #{tpu_custom_call.1} parent=31 // pred_region
          %429 = vsyncadd %s421, 0
          %s430 = smul.addr %s27, 2
          %s431 = smul.addr %s430, 8
          %s432 = scalar_lea.hbm %s3, %s431
          %s434 = sshll.u32 %s424, 4
          %s435 = int_to_ptr.vmem [resolvable:$true] %s434
          %s436 = sshll.u32 %s432, 4
          %s437 = int_to_ptr.hbm [resolvable:$true] %s436
          %439 = dma.vmem_to_hbm [thread:$0]  %s435, 256, %s437, %s421
        $region56: #{tpu_custom_call.1} parent=31 // pred_fallthru
          _
      $region32: #{tpu_custom_call.1} parent=5 // pred_fallthru
        _
      %p440 = scmp.le.s32.totalorder 2, %s18
      // Predicated region
      $region57: #{tpu_custom_call.1} parent=5 // pred_check
        %p441 = pneg %p440
      $region58: #{tpu_custom_call.1} parent=5 // pred_check_branch
        %443 = sbr.rel (%p441) target = $region60
      $region59: #{tpu_custom_call.1} parent=5 // pred_region
        %s444 = ssub.s32 %s18, 2
        // Predicated region
        $region61: #{tpu_custom_call.1} parent=59 // pred_check
          %p445 = pneg %p132
        $region62: #{tpu_custom_call.1} parent=59 // pred_check_branch
          %447 = sbr.rel (%p445) target = $region64
        $region63: #{tpu_custom_call.1} parent=59 // pred_region
          %s448 = sand.u32 %s117, 1
          %s449 = scalar_lea.sflag [#allocation5], %s448
          %s450 = sand.u32 %s117, 1
          %s451 = smul.addr %s450, 16
          %s452 = scalar_lea.vmem [#allocation9], %s451
          %454 = dma.done %s449, 256
        $region64: #{tpu_custom_call.1} parent=59 // pred_fallthru
          _
      $region60: #{tpu_custom_call.1} parent=5 // pred_fallthru
        _
    $region6: #{tpu_custom_call.1} parent=1 // loop_footer
      %s22 = sadd.s32 1, %s18
    $region7: #{tpu_custom_call.1} parent=1 // loop_footer_branch
      %17 = sbr.rel target = $region3
    $region8: #{tpu_custom_call.1} parent=1 // loop_exit
      _
    %455 = vsyncpa [#allocation4], 1
    %s456 = scalar_lea.sflag [#allocation4], 1
    %457 = vsyncpa %s456, 1
    %458 = vsyncpa [#allocation7], 1
    %s459 = scalar_lea.sflag [#allocation7], 1
    %460 = vsyncpa %s459, 1
    %461 = vsyncpa [#allocation5], 1
    %s462 = scalar_lea.sflag [#allocation5], 1
    %463 = vsyncpa %s462, 1

</llo_original>
